<compile_context>
chip_gen: v5e
topology: v5e:2x2
jax: 0.10.0
libtpu: 0.0.40
codegen_flags: <defaults>
</compile_context>

<pallas_src>
import numpy as np
import jax
import jax.numpy as jnp
from jax.experimental import pallas as pl
from jax.experimental.pallas import tpu as pltpu

F32 = jnp.float32


# --------------------------------------------------------------------------
# Kernel 1: span attention over TE expanded samples per grid step
# --------------------------------------------------------------------------
def _pair_attn_kernel(x_ref, mask_ref, w1_ref, b1_ref, w2_ref, b2_ref, mix_ref):
    te, L, H = x_ref.shape
    x = x_ref[...]                                         # (TE, L, H)
    xf = x.reshape(te * L, H)                              # merge leading dims (layout-free)

    # sentence_tran -> tanh : one big MXU matmul for the whole block
    tran = jnp.tanh(
        jnp.dot(xf, w1_ref[...], preferred_element_type=F32) + b1_ref[...])
    tran3 = tran.reshape(te, L, H)

    # sentence_tran_2 score, produced directly with L on the lane axis:
    # (TE,2,H) x (TE,L,H) contracted over H -> (TE,2,L)   (flash 'bqd,bkd->bqk')
    w2b = jnp.broadcast_to(w2_ref[...], (te, 2, H))
    score = jnp.einsum('tkh,tlh->tkl', w2b, tran3,
                       preferred_element_type=F32) + b2_ref[...]   # (TE,2,L)

    # masked softmax over the sequence (last axis == 128-lane axis)
    mask = mask_ref[...]                                   # (TE, 2, L)
    scores = mask * score + (1.0 - mask) * (-10000.0)
    m = jnp.max(scores, axis=-1, keepdims=True)
    e = jnp.exp(scores - m)
    probs = e / jnp.sum(e, axis=-1, keepdims=True)
    # NOTE: dropout on attention_probs is identity (eval mode / dropout == 0).

    # mix = probs @ top_vec, batched over the TE samples ('bqk,bkd->bqd')
    mix_ref[...] = jnp.einsum('tkl,tlh->tkh', probs, x,
                              preferred_element_type=F32)


def _choose_te(E, L, H, budget_bytes=24 * 1024 * 1024):
    # Rough per-sample VMEM footprint inside kernel 1 (x + tran live copies
    # plus double-buffered x/mask/mix DMA blocks), all f32. Budget is kept
    # well below v7x's 64 MiB physical VMEM.
    per_sample = 4 * (4 * L * H + 4 * L + 4 * H)
    te = max(1, min(E, budget_bytes // max(per_sample, 1)))
    if E >= 2:
        te = min(te, (E + 1) // 2)     # keep >= 2 grid steps (v7x: 2 TensorCores)
    return te


def pair_attention(seq, mask, params, te=None):
    E, L, H = seq.shape
    te = _choose_te(E, L, H) if te is None else te
    Ep = ((E + te - 1) // te) * te
    if Ep != E:
        pad = Ep - E
        seq = jnp.pad(seq, ((0, pad), (0, 0), (0, 0)))
        mask = jnp.pad(mask, ((0, pad), (0, 0), (0, 0)))   # zero masks -> harmless rows

    vmem_full = pl.BlockSpec(memory_space=pltpu.MemorySpace.VMEM)  # untiled, not double-buffered
    mix = pl.pallas_call(
        _pair_attn_kernel,
        out_shape=jax.ShapeDtypeStruct((Ep, 2, H), F32),
        grid=(Ep // te,),
        in_specs=[
            pl.BlockSpec((te, L, H), lambda i: (i, 0, 0)),   # sequence_output
            pl.BlockSpec((te, 2, L), lambda i: (i, 0, 0)),   # span masks (lane-dense)
            vmem_full,   # w1 (H, H)
            vmem_full,   # b1 (1, H)
            vmem_full,   # w2 (1, H)  == sentence_tran_2.weight (row form)
            vmem_full,   # b2 (1, 1)
        ],
        out_specs=pl.BlockSpec((te, 2, H), lambda i: (i, 0, 0)),
        compiler_params=pltpu.CompilerParams(
            dimension_semantics=("parallel",),
            vmem_limit_bytes=48 * 1024 * 1024),
    )(seq, mask, params['w1'], params['b1'], params['w2'], params['b2'])
    return mix[:E]


# --------------------------------------------------------------------------
# Kernel 2: edge attention, blocked over B*S sentence rows
# --------------------------------------------------------------------------
def _edge_attn_kernel(st_ref, w_ref, out_ref):
    st = st_ref[...]                                    # (TR, EDGE, H)
    q = jnp.sum(st * w_ref[...], axis=-1)               # (TR, EDGE)  linear_in_2 (no bias)
    m = jnp.max(q, axis=-1, keepdims=True)
    e = jnp.exp(q - m)
    attn = e / jnp.sum(e, axis=-1, keepdims=True)       # softmax over edges
    # NOTE: matches torch — zero-padded edge slots still get exp(0) weight.
    out_ref[...] = jnp.sum(attn[:, :, None] * st, axis=1)   # (TR, H)


def edge_attention(sentence_tensor, w_in2, budget_bytes=16 * 1024 * 1024):
    B, S, EDGE, H = sentence_tensor.shape
    rows = B * S
    st = sentence_tensor.reshape(rows, EDGE, H)
    per_row = 4 * (2 * EDGE * H + 2 * H)                 # dbl-buffered in + out, f32
    rows8 = ((rows + 7) // 8) * 8
    tr = min(rows8, 512, max(8, (budget_bytes // max(per_row, 1)) // 8 * 8))
    rows_p = ((rows + tr - 1) // tr) * tr
    if rows_p != rows:
        st = jnp.pad(st, ((0, rows_p - rows), (0, 0), (0, 0)))
    out = pl.pallas_call(
        _edge_attn_kernel,
        out_shape=jax.ShapeDtypeStruct((rows_p, H), F32),
        grid=(rows_p // tr,),
        in_specs=[pl.BlockSpec((tr, EDGE, H), lambda i: (i, 0, 0)),
                  pl.BlockSpec(memory_space=pltpu.MemorySpace.VMEM)],  # w_in2 (1, H)
        out_specs=pl.BlockSpec((tr, H), lambda i: (i, 0)),
        compiler_params=pltpu.CompilerParams(
            dimension_semantics=("parallel",),
            vmem_limit_bytes=48 * 1024 * 1024),
    )(st, w_in2)
    return out[:rows].reshape(B, S, H)


# --------------------------------------------------------------------------
# Full forward (glue around the two kernels)
# --------------------------------------------------------------------------
def hierarchical_attention_forward(params, sequence_output, pairs_list,
                                   passage_length, pairs_num, sep_positions,
                                   mask_cls, cls_pooled_output):
    E, L, H = sequence_output.shape
    B, P, _ = np.asarray(sep_positions).shape
    S = np.asarray(mask_cls).shape[1]

    # --- span masks, built on device in the lane-dense (E, 2, L) layout ---
    sep = jnp.asarray(sep_positions).reshape(E, 2).astype(jnp.int32)
    pos = jnp.arange(L, dtype=jnp.int32)[None, None, :]          # (1,1,L)
    sep0 = sep[:, 0][:, None, None]
    sep1 = sep[:, 1][:, None, None]
    m0 = (pos >= 1) & (pos <= sep0)
    m1 = (pos >= sep0 + 1) & (pos <= sep1)
    mask = jnp.concatenate([m0, m1], axis=1).astype(F32)         # (E, 2, L)

    # --- hot path 1: Pallas kernel (span attention -> mix) ---
    mix_flat = pair_attention(sequence_output, mask, params)     # (E, 2, H)
    mix = mix_flat.reshape(B, P, 2, H)

    # --- cls relationship heads: one fused (E,H)@(H,6) matmul in plain XLA ---
    w_heads = jnp.concatenate([params['wp'], params['wh1'], params['wh2']], axis=1)
    b_heads = jnp.concatenate([params['bp'], params['bh1'], params['bh2']], axis=1)
    cls_all = jnp.dot(cls_pooled_output, w_heads,
                      preferred_element_type=F32) + b_heads      # (E, 6)
    cls_score = cls_all[:, 0:2]
    cls_h1 = cls_all[:, 2:4]
    cls_h2 = cls_all[:, 4:6]

    cls_score_b = cls_score.reshape(B, P, 2)
    cls_h1_b = cls_h1.reshape(B, P, 2)
    cls_h2_b = cls_h2.reshape(B, P, 2)
    cls_pooled_b = cls_pooled_output.reshape(B, P, H)

    # --- data-dependent scatter (host-computed indices, jnp scatter) ---
    pairs_np = np.asarray(pairs_list)
    plen = [int(x) for x in np.asarray(passage_length)]
    pnum = [int(x) for x in np.asarray(pairs_num)]
    edge_num = int(pnum[0] / plen[0] * 2)
    # TODO(synk): assumes uniform passage_length / pairs_num across the batch so
    # the per-passage sentence tensor has a static shape; ragged batches would
    # need padding + masking of the unused rows.
    sb, ss, se, mb, mj, mk = [], [], [], [], [], []
    cb, cp0, cp1, cj = [], [], [], []
    for i in range(B):
        count = [0] * plen[i]
        for j in range(pnum[i]):
            p0, p1 = int(pairs_np[i, j, 0]), int(pairs_np[i, j, 1])
            sb.append(i); ss.append(p0); se.append(count[p0])
            mb.append(i); mj.append(j); mk.append(0)
            count[p0] += 1
            sb.append(i); ss.append(p1); se.append(count[p1])
            mb.append(i); mj.append(j); mk.append(1)
            count[p1] += 1
            cb.append(i); cp0.append(p0); cp1.append(p1); cj.append(j)

    sb, ss, se = jnp.array(sb), jnp.array(ss), jnp.array(se)
    mbj = (jnp.array(mb), jnp.array(mj), jnp.array(mk))
    cb_, cp0_, cp1_ = jnp.array(cb), jnp.array(cp0), jnp.array(cp1)
    cbj = (cb_, jnp.array(cj))

    # TODO(synk): at production sizes these XLA scatters (esp. the BxSxSxH
    # cls_output_matrix_nn) move more HBM bytes than both kernels; a dense
    # one-hot matmul or a Pallas scatter with prefetched index tables would help.
    sentence_tensor = jnp.zeros((B, S, edge_num, H), F32).at[sb, ss, se].set(mix[mbj])
    cls_output_matrix_nn = jnp.zeros((B, S, S, H), F32).at[cb_, cp0_, cp1_].set(cls_pooled_b[cbj])
    cls_score_matrix_nn = jnp.zeros((B, S, S, 2), F32).at[cb_, cp0_, cp1_].set(cls_score_b[cbj])
    cls_score_matrix_nn_his1 = jnp.zeros((B, S, S, 2), F32).at[cb_, cp0_, cp1_].set(cls_h1_b[cbj])
    cls_score_matrix_nn_his2 = jnp.zeros((B, S, S, 2), F32).at[cb_, cp0_, cp1_].set(cls_h2_b[cbj])

    # --- hot path 2: Pallas kernel (edge attention -> final_seq_matrix) ---
    final_seq_matrix = edge_attention(sentence_tensor, params['w_in2'])

    return (mix, final_seq_matrix, cls_output_matrix_nn, cls_score,
            cls_score_matrix_nn, cls_score_matrix_nn_his1,
            cls_score_matrix_nn_his2)


# --------------------------------------------------------------------------
# Deterministic parameter init (matches nn.Linear shapes)
# --------------------------------------------------------------------------
def init_params(key, H):
    ks = jax.random.split(key, 11)
    r = lambda k, s: jax.random.normal(k, s, F32) * 0.1
    return {
        'w1':    r(ks[0], (H, H)),    # sentence_tran.weight^T
        'b1':    r(ks[1], (1, H)),    # sentence_tran.bias
        'w2':    r(ks[2], (1, H)),    # sentence_tran_2.weight (row form)
        'b2':    r(ks[3], (1, 1)),    # sentence_tran_2.bias
        'w_in2': r(ks[4], (1, H)),    # linear_in_2.weight (bias=False)
        'wp':    r(ks[5], (H, 2)), 'bp':  r(ks[6], (1, 2)),   # pairwise_relationship
        'wh1':   r(ks[7], (H, 2)), 'bh1': r(ks[8], (1, 2)),   # h1_relationship
        'wh2':   r(ks[9], (H, 2)), 'bh2': r(ks[10], (1, 2)),  # h2_relationship
    }


if __name__ == "__main__":
    B, P, S, L, H = 2, 6, 4, 16, 32      # batch, max_pair_num, max_num_sen, max_len, d_model
    E = B * P                            # expanded_sample_num

    key = jax.random.PRNGKey(0)
    kp, kx, kc = jax.random.split(key, 3)
    params = init_params(kp, H)

    sequence_output = jax.random.normal(kx, (E, L, H), F32)
    cls_pooled_output = jax.random.normal(kc, (E, H), F32)

    # all ordered sentence pairs (i<j) for S=4 sentences -> 6 pairs, edge_num=3
    pairs_list = np.array([[(a, b) for a in range(S) for b in range(a + 1, S)]
                           for _ in range(B)], np.int32)         # (B, P, 2)
    passage_length = np.array([S] * B, np.int32)
    pairs_num = np.array([P] * B, np.int32)
    mask_cls = np.ones((B, S), np.float32)

    sep_positions = np.zeros((B, P, 2), np.int32)
    for i in range(B):
        for j in range(P):
            s0 = 3 + (j % 4)
            s1 = s0 + 4 + ((i + j) % 3)
            sep_positions[i, j] = (s0, s1)

    outs = hierarchical_attention_forward(
        params, sequence_output, pairs_list, passage_length, pairs_num,
        sep_positions, mask_cls, cls_pooled_output)
    outs = jax.block_until_ready(outs)
    (mix, final_seq, cls_out_mat, cls_score,
     cls_score_mat, cls_mat_h1, cls_mat_h2) = outs

    # ---- pure-JAX reference check of kernel 1 (default matmul precision, so
    #      loose tolerance absorbs op-ordering / bf16-pass differences) ----
    sep = sep_positions.reshape(E, 2)
    pos = np.arange(L)[None, :]
    m0 = (pos >= 1) & (pos <= sep[:, 0:1])
    m1 = (pos >= sep[:, 0:1] + 1) & (pos <= sep[:, 1:2])
    masks = jnp.asarray(np.stack([m0, m1], axis=1).astype(np.float32))   # (E,2,L)
    tran = jnp.tanh(jnp.einsum('elh,hk->elk', sequence_output, params['w1'])
                    + params['b1'][0])
    score = jnp.einsum('elh,kh->elk', tran, params['w2'])[..., 0] + params['b2'][0, 0]
    scr = masks * score[:, None, :] + (1.0 - masks) * (-10000.0)
    probs = jax.nn.softmax(scr, axis=-1)
    mix_ref = jnp.einsum('ekl,elh->ekh', probs, sequence_output).reshape(B, P, 2, H)
    cls_ref = jnp.dot(cls_pooled_output, params['wp']) + params['bp'][0]
    assert np.allclose(np.asarray(mix), np.asarray(mix_ref), atol=5e-2, rtol=5e-2)
    assert np.allclose(np.asarray(cls_score), np.asarray(cls_ref), atol=1e-2, rtol=1e-2)

    # ---- numpy reference for kernel 2 (built from the kernel's own mix) ----
    mix_np = np.asarray(mix)
    w_in2 = np.asarray(params['w_in2'])[0]                      # (H,)
    final_ref = np.zeros((B, S, H), np.float32)
    for i in range(B):
        length = int(passage_length[i])
        edge_num = int(pairs_num[i] / length * 2)
        st_i = np.zeros((length, edge_num, H), np.float32)
        count = [0] * length
        for j in range(int(pairs_num[i])):
            p0, p1 = int(pairs_list[i, j, 0]), int(pairs_list[i, j, 1])
            st_i[p0, count[p0]] = mix_np[i, j, 0]; count[p0] += 1
            st_i[p1, count[p1]] = mix_np[i, j, 1]; count[p1] += 1
        q = st_i @ w_in2
        q = q - q.max(axis=-1, keepdims=True)
        aw = np.exp(q); aw = aw / aw.sum(axis=-1, keepdims=True)
        final_ref[i, :length] = (aw[:, :, None] * st_i).sum(axis=1)
    assert np.allclose(np.asarray(final_seq), final_ref, atol=1e-3, rtol=1e-3)

    print("KERNEL_OK")
</pallas_src>

<mosaic_0001>
module attributes {stable_mosaic.version = 11 : i64} {
  func.func @_pair_attn_kernel(%arg0: i32, %arg1: memref<6x16x32xf32, #tpu.memory_space<vmem>>, %arg2: memref<6x2x16xf32, #tpu.memory_space<vmem>>, %arg3: memref<32x32xf32, #tpu.memory_space<vmem>>, %arg4: memref<1x32xf32, #tpu.memory_space<vmem>>, %arg5: memref<1x32xf32, #tpu.memory_space<vmem>>, %arg6: memref<1x1xf32, #tpu.memory_space<vmem>>, %arg7: memref<6x2x32xf32, #tpu.memory_space<vmem>>) attributes {dimension_semantics = [#tpu.dimension_semantics<parallel>], iteration_bounds = array<i64: 2>, scalar_prefetch = 0 : i64, scratch_operands = 0 : i64, tpu.core_type = #tpu.core_type<tc>, window_params = [{transform_indices = @transform_0, window_bounds = array<i64: 6, 16, 32>}, {transform_indices = @transform_1, window_bounds = array<i64: 6, 2, 16>}, {pipeline_mode = #tpu.pipeline_mode<synchronous>, transform_indices = @transform_2, window_bounds = array<i64: 32, 32>}, {pipeline_mode = #tpu.pipeline_mode<synchronous>, transform_indices = @transform_3, window_bounds = array<i64: 1, 32>}, {pipeline_mode = #tpu.pipeline_mode<synchronous>, transform_indices = @transform_4, window_bounds = array<i64: 1, 32>}, {pipeline_mode = #tpu.pipeline_mode<synchronous>, transform_indices = @transform_5, window_bounds = array<i64: 1, 1>}, {transform_indices = @transform_6, window_bounds = array<i64: 6, 2, 32>}]} {
    %c0 = arith.constant 0 : index
    %c0_0 = arith.constant 0 : index
    %c0_1 = arith.constant 0 : index
    %0 = vector.load %arg1[%c0, %c0_0, %c0_1] : memref<6x16x32xf32, #tpu.memory_space<vmem>>, vector<6x16x32xf32>
    %1 = vector.shape_cast %0 : vector<6x16x32xf32> to vector<96x32xf32>
    %c0_2 = arith.constant 0 : index
    %c0_3 = arith.constant 0 : index
    %2 = vector.load %arg3[%c0_2, %c0_3] : memref<32x32xf32, #tpu.memory_space<vmem>>, vector<32x32xf32>
    %cst = arith.constant dense<0.000000e+00> : vector<96x32xf32>
    %3 = tpu.matmul %1, %2, %cst {dimension_numbers = #tpu.dot_dimension_numbers<[1], [0], [0], [1], [0, 0, 1, 1], [], []>} : vector<96x32xf32>, vector<32x32xf32>, vector<96x32xf32> -> vector<96x32xf32>
    %c0_4 = arith.constant 0 : index
    %c0_5 = arith.constant 0 : index
    %4 = vector.load %arg4[%c0_4, %c0_5] : memref<1x32xf32, #tpu.memory_space<vmem>>, vector<1x32xf32>
    %5 = vector.broadcast %4 : vector<1x32xf32> to vector<96x32xf32>
    %6 = arith.addf %3, %5 : vector<96x32xf32>
    %7 = math.tanh %6 : vector<96x32xf32>
    %8 = vector.shape_cast %7 : vector<96x32xf32> to vector<6x16x32xf32>
    %c0_6 = arith.constant 0 : index
    %c0_7 = arith.constant 0 : index
    %9 = vector.load %arg5[%c0_6, %c0_7] : memref<1x32xf32, #tpu.memory_space<vmem>>, vector<1x32xf32>
    %10 = vector.shape_cast %9 : vector<1x32xf32> to vector<1x1x32xf32>
    %11 = vector.broadcast %10 : vector<1x1x32xf32> to vector<6x2x32xf32>
    "tpu.trace_start"() <{level = 10 : i32, message = "tkh,tlh->tkl"}> : () -> ()
    %cst_8 = arith.constant dense<0.000000e+00> : vector<6x2x16xf32>
    %12 = tpu.matmul %11, %8, %cst_8 {dimension_numbers = #tpu.dot_dimension_numbers<[2], [2], [1], [1], [0, 0, 0, 1, 1, 1], [0], [0]>} : vector<6x2x32xf32>, vector<6x16x32xf32>, vector<6x2x16xf32> -> vector<6x2x16xf32>
    "tpu.trace_stop"() : () -> ()
    %c0_9 = arith.constant 0 : index
    %c0_10 = arith.constant 0 : index
    %13 = vector.load %arg6[%c0_9, %c0_10] : memref<1x1xf32, #tpu.memory_space<vmem>>, vector<1x1xf32>
    %14 = vector.shape_cast %13 : vector<1x1xf32> to vector<1x1x1xf32>
    %15 = vector.broadcast %14 : vector<1x1x1xf32> to vector<6x2x16xf32>
    %16 = arith.addf %12, %15 : vector<6x2x16xf32>
    %c0_11 = arith.constant 0 : index
    %c0_12 = arith.constant 0 : index
    %c0_13 = arith.constant 0 : index
    %17 = vector.load %arg2[%c0_11, %c0_12, %c0_13] : memref<6x2x16xf32, #tpu.memory_space<vmem>>, vector<6x2x16xf32>
    %18 = arith.mulf %17, %16 : vector<6x2x16xf32>
    %cst_14 = arith.constant 1.000000e+00 : f32
    %19 = vector.broadcast %cst_14 : f32 to vector<6x2x16xf32>
    %20 = arith.subf %19, %17 : vector<6x2x16xf32>
    %cst_15 = arith.constant -1.000000e+04 : f32
    %21 = vector.broadcast %cst_15 : f32 to vector<6x2x16xf32>
    %22 = arith.mulf %20, %21 : vector<6x2x16xf32>
    %23 = arith.addf %18, %22 : vector<6x2x16xf32>
    %cst_16 = arith.constant dense<0xFF800000> : vector<6x2xf32>
    %24 = vector.multi_reduction <maximumf>, %23, %cst_16 [2] : vector<6x2x16xf32> to vector<6x2xf32>
    %25 = vector.shape_cast %24 : vector<6x2xf32> to vector<6x2x1xf32>
    %26 = vector.broadcast %25 : vector<6x2x1xf32> to vector<6x2x16xf32>
    %27 = arith.subf %23, %26 : vector<6x2x16xf32>
    %28 = math.exp %27 : vector<6x2x16xf32>
    %cst_17 = arith.constant dense<0.000000e+00> : vector<6x2xf32>
    %29 = vector.multi_reduction <add>, %28, %cst_17 [2] : vector<6x2x16xf32> to vector<6x2xf32>
    %30 = vector.shape_cast %29 : vector<6x2xf32> to vector<6x2x1xf32>
    %31 = vector.broadcast %30 : vector<6x2x1xf32> to vector<6x2x16xf32>
    %32 = arith.divf %28, %31 : vector<6x2x16xf32>
    "tpu.trace_start"() <{level = 10 : i32, message = "tkl,tlh->tkh"}> : () -> ()
    %cst_18 = arith.constant dense<0.000000e+00> : vector<6x2x32xf32>
    %33 = tpu.matmul %32, %0, %cst_18 {dimension_numbers = #tpu.dot_dimension_numbers<[2], [1], [1], [2], [0, 0, 0, 1, 1, 2], [0], [0]>} : vector<6x2x16xf32>, vector<6x16x32xf32>, vector<6x2x32xf32> -> vector<6x2x32xf32>
    "tpu.trace_stop"() : () -> ()
    %c0_19 = arith.constant 0 : index
    %c0_20 = arith.constant 0 : index
    %c0_21 = arith.constant 0 : index
    %34 = vector.load %arg7[%c0_19, %c0_20, %c0_21] : memref<6x2x32xf32, #tpu.memory_space<vmem>>, vector<6x2x32xf32>
    tpu.vector_store %arg7[%c0_19, %c0_20, %c0_21], %33 {strides = array<i32>} : memref<6x2x32xf32, #tpu.memory_space<vmem>>, vector<6x2x32xf32>,
    return
  }
  func.func @transform_0(%arg0: i32) -> (i32, i32, i32) {
    %c0_i32 = arith.constant 0 : i32
    %c0_i32_0 = arith.constant 0 : i32
    %c0_i32_1 = arith.constant 0 : i32
    return %arg0, %c0_i32, %c0_i32_0 : i32, i32, i32
  }
  func.func @transform_1(%arg0: i32) -> (i32, i32, i32) {
    %c0_i32 = arith.constant 0 : i32
    %c0_i32_0 = arith.constant 0 : i32
    %c0_i32_1 = arith.constant 0 : i32
    return %arg0, %c0_i32, %c0_i32_0 : i32, i32, i32
  }
  func.func @transform_2(%arg0: i32) -> (i32, i32) {
    %c0_i32 = arith.constant 0 : i32
    %c0_i32_0 = arith.constant 0 : i32
    %c0_i32_1 = arith.constant 0 : i32
    return %c0_i32, %c0_i32_0 : i32, i32
  }
  func.func @transform_3(%arg0: i32) -> (i32, i32) {
    %c0_i32 = arith.constant 0 : i32
    %c0_i32_0 = arith.constant 0 : i32
    %c0_i32_1 = arith.constant 0 : i32
    return %c0_i32, %c0_i32_0 : i32, i32
  }
  func.func @transform_4(%arg0: i32) -> (i32, i32) {
    %c0_i32 = arith.constant 0 : i32
    %c0_i32_0 = arith.constant 0 : i32
    %c0_i32_1 = arith.constant 0 : i32
    return %c0_i32, %c0_i32_0 : i32, i32
  }
  func.func @transform_5(%arg0: i32) -> (i32, i32) {
    %c0_i32 = arith.constant 0 : i32
    %c0_i32_0 = arith.constant 0 : i32
    %c0_i32_1 = arith.constant 0 : i32
    return %c0_i32, %c0_i32_0 : i32, i32
  }
  func.func @transform_6(%arg0: i32) -> (i32, i32, i32) {
    %c0_i32 = arith.constant 0 : i32
    %c0_i32_0 = arith.constant 0 : i32
    %c0_i32_1 = arith.constant 0 : i32
    return %arg0, %c0_i32, %c0_i32_0 : i32, i32, i32
  }
}

</mosaic_0001>

<llo_original>
// kernel: tpu_custom_call.1
$region0: #{tpu_custom_call.1}
  #allocation0 [shape = 'u32[]', space=smem, size = 0x4, offset = 0x4, fixed_abs, tag = 'smem constant byte address 0x4 - core index']
  #allocation1 [shape = 'u32[72,128]{1,0:T(1,128)}', space=vmem, size = 0x9000, scoped, tag = 'internal scratch']
  #allocation2 [shape = 'f32[1,1]{1,0:T(1,128)S(1)}', space=vmem, size = 0x200, scoped, tag = 'scoped memory for tpu_custom_call.1']
  %s0 = inlined_call_operand.hbm [shape: f32[12,16,32], index: 0, kind: input, shape index: {}]
  %s1 = inlined_call_operand.hbm [shape: f32[12,2,16], index: 1, kind: input, shape index: {}]
  %s2 = inlined_call_operand.hbm [shape: f32[32,32], index: 2, kind: input, shape index: {}]
  %s3 = inlined_call_operand.vmem [shape: f32[1,32], index: 3, kind: input, shape index: {}]
  %s4 = inlined_call_operand.vmem [shape: f32[1,32], index: 4, kind: input, shape index: {}]
  %s5 = inlined_call_operand.<no memory space> [shape: f32[1,1], index: 5, kind: input, shape index: {}]
  %s6 = inlined_call_operand.hbm [shape: f32[12,2,32], index: 6, kind: output, shape index: {}]
  %s7 = sld [smem:[#allocation0]]
  $region69: #{tpu_custom_call.1} parent=0
    _
  %s9 = ssub.s32 1, %s7
  %s10 = scalar_select 0, %s9, %s7
  %v11 = vstv %s5
  %12 = vst [vmem:[#allocation2] sm:$0x1] %v11
  $region1: #{tpu_custom_call.1} parent=0
    #allocation3 [shape = 'u8[98304]{0}', space=vmem, size = 0x18000, scoped, tag = 'input window, operand 0']
    #allocation4 [shape = 's32[2]{0}', space=sflag, size = 0x8, scoped, tag = 'scoped memory for tpu_custom_call.1']
    #allocation5 [shape = 's32[2]{0}', space=sflag, size = 0x8, scoped, tag = 'scoped memory for tpu_custom_call.1']
    #allocation6 [shape = 'u8[12288]{0}', space=vmem, size = 0x3000, scoped, tag = 'input window, operand 1']
    #allocation7 [shape = 's32[2]{0}', space=sflag, size = 0x8, scoped, tag = 'scoped memory for tpu_custom_call.1']
    #allocation8 [shape = 'u8[16384]{0}', space=vmem, size = 0x4000, scoped, tag = 'input window, operand 2, single buffered']
    #allocation9 [shape = 'u8[12288]{0}', space=vmem, size = 0x3000, scoped, tag = 'output window, operand 0']
    %13 = vsyncpa [#allocation4], 0
    %s14 = scalar_lea.sflag [#allocation4], 1
    %15 = vsyncpa %s14, 0
    %16 = vsyncpa [#allocation7], 0
    %s17 = scalar_lea.sflag [#allocation7], 1
    %18 = vsyncpa %s17, 0
    %19 = vsyncpa [#allocation5], 0
    %s20 = scalar_lea.sflag [#allocation5], 1
    %21 = vsyncpa %s20, 0
    loop: start=0, step=1, limit=4
    $region2: #{tpu_custom_call.1} parent=1 // loop_pre_header
      _
    $region3: #{tpu_custom_call.1} parent=1 // loop_header
      %s23 = sphi 0, %s27
      %p24 = scmp.ge.s32.totalorder %s23, 4
      %s33 = sphi 0, %s35
      %s36 = sphi 0, %s33
      %s37 = sphi 0, %s36
      %s53 = sphi 0, %s37
      %s59 = sphi 0, %s61
      %s62 = sphi 0, %s59
      %s63 = sphi 0, %s62
      %s79 = sphi 0, %s63
      %s83 = sphi 0, %s83
      %s85 = sphi 0, %s83
      %s86 = sphi 0, %s85
      %s100 = sphi 0, %s86
      %s104 = sphi 0, %s104
      %s106 = sphi 0, %s104
      %s107 = sphi 0, %s106
      %s121 = sphi 0, %s107
      %s125 = sphi 0, %s125
      %s127 = sphi 0, %s125
      %s128 = sphi 0, %s127
      %s142 = sphi 0, %s128
      %s146 = sphi 0, %s146
      %s148 = sphi 0, %s146
      %s149 = sphi 0, %s148
      %s163 = sphi 0, %s149
      %s169 = sphi 0, %s171
      %s172 = sphi 0, %s169
      %s173 = sphi 0, %s172
      %s189 = sphi 0, %s173
    $region4: #{tpu_custom_call.1} parent=1 // loop_header_branch
      %26 = sbr.rel (%p24) target = $region8
    $region5: #{tpu_custom_call.1} parent=1 // loop_body
      %s28 = ssub.s32 %s23, 1
      %s29 = ssub.s32 %s23, 2
      %s30 = sadd.s32 %s23, 1
      %s31 = ssub.s32 %s23, %s30
      %p32 = scmp.eq.s32.totalorder %s31, 0
      %s34 = sadd.s32 %s33, 1
      %s35 = scalar_select %p32, %s33, %s34
      %p38 = pneg %p32
      %p39 = scmp.eq.s32.totalorder %s23, 1
      %p40 = por %p38, %p39
      %p41 = scmp.ne.s32.totalorder %s33, %s36
      %p42 = scmp.eq.s32.totalorder %s23, 0
      %p43 = por %p41, %p42
      %p44 = scmp.ne.s32.totalorder %s33, %s36
      %p45 = scmp.eq.s32.totalorder %s28, 1
      %p46 = por %p44, %p45
      %p47 = scmp.ne.s32.totalorder %s36, %s37
      %p48 = scmp.eq.s32.totalorder %s28, 0
      %p49 = por %p47, %p48
      %p50 = scmp.ne.s32.totalorder %s36, %s37
      %p51 = scmp.eq.s32.totalorder %s29, 1
      %p52 = por %p50, %p51
      %p54 = scmp.ne.s32.totalorder %s37, %s53
      %p55 = scmp.eq.s32.totalorder %s29, 0
      %p56 = por %p54, %p55
      %s57 = ssub.s32 %s23, %s30
      %p58 = scmp.eq.s32.totalorder %s57, 0
      %s60 = sadd.s32 %s59, 1
      %s61 = scalar_select %p58, %s59, %s60
      %p64 = pneg %p58
      %p65 = scmp.eq.s32.totalorder %s23, 1
      %p66 = por %p64, %p65
      %p67 = scmp.ne.s32.totalorder %s59, %s62
      %p68 = scmp.eq.s32.totalorder %s23, 0
      %p69 = por %p67, %p68
      %p70 = scmp.ne.s32.totalorder %s59, %s62
      %p71 = scmp.eq.s32.totalorder %s28, 1
      %p72 = por %p70, %p71
      %p73 = scmp.ne.s32.totalorder %s62, %s63
      %p74 = scmp.eq.s32.totalorder %s28, 0
      %p75 = por %p73, %p74
      %p76 = scmp.ne.s32.totalorder %s62, %s63
      %p77 = scmp.eq.s32.totalorder %s29, 1
      %p78 = por %p76, %p77
      %p80 = scmp.ne.s32.totalorder %s63, %s79
      %p81 = scmp.eq.s32.totalorder %s29, 0
      %p82 = por %p80, %p81
      %s84 = sadd.s32 %s83, 1
      %p87 = scmp.eq.s32.totalorder %s23, 1
      %p88 = scmp.ne.s32.totalorder %s83, %s85
      %p89 = scmp.eq.s32.totalorder %s23, 0
      %p90 = por %p88, %p89
      %p91 = scmp.ne.s32.totalorder %s83, %s85
      %p92 = scmp.eq.s32.totalorder %s28, 1
      %p93 = por %p91, %p92
      %p94 = scmp.ne.s32.totalorder %s85, %s86
      %p95 = scmp.eq.s32.totalorder %s28, 0
      %p96 = por %p94, %p95
      %p97 = scmp.ne.s32.totalorder %s85, %s86
      %p98 = scmp.eq.s32.totalorder %s29, 1
      %p99 = por %p97, %p98
      %p101 = scmp.ne.s32.totalorder %s86, %s100
      %p102 = scmp.eq.s32.totalorder %s29, 0
      %p103 = por %p101, %p102
      %s105 = sadd.s32 %s104, 1
      %p108 = scmp.eq.s32.totalorder %s23, 1
      %p109 = scmp.ne.s32.totalorder %s104, %s106
      %p110 = scmp.eq.s32.totalorder %s23, 0
      %p111 = por %p109, %p110
      %p112 = scmp.ne.s32.totalorder %s104, %s106
      %p113 = scmp.eq.s32.totalorder %s28, 1
      %p114 = por %p112, %p113
      %p115 = scmp.ne.s32.totalorder %s106, %s107
      %p116 = scmp.eq.s32.totalorder %s28, 0
      %p117 = por %p115, %p116
      %p118 = scmp.ne.s32.totalorder %s106, %s107
      %p119 = scmp.eq.s32.totalorder %s29, 1
      %p120 = por %p118, %p119
      %p122 = scmp.ne.s32.totalorder %s107, %s121
      %p123 = scmp.eq.s32.totalorder %s29, 0
      %p124 = por %p122, %p123
      %s126 = sadd.s32 %s125, 1
      %p129 = scmp.eq.s32.totalorder %s23, 1
      %p130 = scmp.ne.s32.totalorder %s125, %s127
      %p131 = scmp.eq.s32.totalorder %s23, 0
      %p132 = por %p130, %p131
      %p133 = scmp.ne.s32.totalorder %s125, %s127
      %p134 = scmp.eq.s32.totalorder %s28, 1
      %p135 = por %p133, %p134
      %p136 = scmp.ne.s32.totalorder %s127, %s128
      %p137 = scmp.eq.s32.totalorder %s28, 0
      %p138 = por %p136, %p137
      %p139 = scmp.ne.s32.totalorder %s127, %s128
      %p140 = scmp.eq.s32.totalorder %s29, 1
      %p141 = por %p139, %p140
      %p143 = scmp.ne.s32.totalorder %s128, %s142
      %p144 = scmp.eq.s32.totalorder %s29, 0
      %p145 = por %p143, %p144
      %s147 = sadd.s32 %s146, 1
      %p150 = scmp.eq.s32.totalorder %s23, 1
      %p151 = scmp.ne.s32.totalorder %s146, %s148
      %p152 = scmp.eq.s32.totalorder %s23, 0
      %p153 = por %p151, %p152
      %p154 = scmp.ne.s32.totalorder %s146, %s148
      %p155 = scmp.eq.s32.totalorder %s28, 1
      %p156 = por %p154, %p155
      %p157 = scmp.ne.s32.totalorder %s148, %s149
      %p158 = scmp.eq.s32.totalorder %s28, 0
      %p159 = por %p157, %p158
      %p160 = scmp.ne.s32.totalorder %s148, %s149
      %p161 = scmp.eq.s32.totalorder %s29, 1
      %p162 = por %p160, %p161
      %p164 = scmp.ne.s32.totalorder %s149, %s163
      %p165 = scmp.eq.s32.totalorder %s29, 0
      %p166 = por %p164, %p165
      %s167 = ssub.s32 %s23, %s30
      %p168 = scmp.eq.s32.totalorder %s167, 0
      %s170 = sadd.s32 %s169, 1
      %s171 = scalar_select %p168, %s169, %s170
      %p174 = pneg %p168
      %p175 = scmp.eq.s32.totalorder %s23, 1
      %p176 = por %p174, %p175
      %p177 = scmp.ne.s32.totalorder %s169, %s172
      %p178 = scmp.eq.s32.totalorder %s23, 0
      %p179 = por %p177, %p178
      %p180 = scmp.ne.s32.totalorder %s169, %s172
      %p181 = scmp.eq.s32.totalorder %s28, 1
      %p182 = por %p180, %p181
      %p183 = scmp.ne.s32.totalorder %s172, %s173
      %p184 = scmp.eq.s32.totalorder %s28, 0
      %p185 = por %p183, %p184
      %p186 = scmp.ne.s32.totalorder %s172, %s173
      %p187 = scmp.eq.s32.totalorder %s29, 1
      %p188 = por %p186, %p187
      %p190 = scmp.ne.s32.totalorder %s173, %s189
      %p191 = scmp.eq.s32.totalorder %s29, 0
      %p192 = por %p190, %p191
      %p193 = scmp.le.s32.totalorder 1, %s23
      %p194 = scmp.lt.s32.totalorder %s23, 3
      %p195 = pnand %p193, %p194
      %p196 = pneg %p195
      // Predicated region
      $region9: #{tpu_custom_call.1} parent=5 // pred_check
        _
      $region10: #{tpu_custom_call.1} parent=5 // pred_check_branch
        %198 = sbr.rel (%p195) target = $region12
      $region11: #{tpu_custom_call.1} parent=5 // pred_region
        %s199 = ssub.s32 %s23, 1
        // Predicated region
        $region13: #{tpu_custom_call.1} parent=11 // pred_check
          %p200 = pneg %p96
        $region14: #{tpu_custom_call.1} parent=11 // pred_check_branch
          %202 = sbr.rel (%p200) target = $region16
        $region15: #{tpu_custom_call.1} parent=11 // pred_region
          %204 = vsyncadd [#allocation7], 0
          %s205 = sshll.u32 %s2, 4
          %s206 = int_to_ptr.hbm [resolvable:$true] %s205
          %s207 = sshll.u32 [#allocation8], 4
          %s208 = int_to_ptr.vmem [resolvable:$true] %s207
          %213 = dma.hbm_to_vmem [thread:$0]  %s206, 512, %s208, [#allocation7], 128, 128, 8
        $region16: #{tpu_custom_call.1} parent=11 // pred_fallthru
          _
        // Predicated region
        $region17: #{tpu_custom_call.1} parent=11 // pred_check
          %p214 = pneg %p117
        $region18: #{tpu_custom_call.1} parent=11 // pred_check_branch
          %216 = sbr.rel (%p214) target = $region20
        $region19: #{tpu_custom_call.1} parent=11 // pred_region
          _
        $region20: #{tpu_custom_call.1} parent=11 // pred_fallthru
          _
        // Predicated region
        $region21: #{tpu_custom_call.1} parent=11 // pred_check
          %p217 = pneg %p138
        $region22: #{tpu_custom_call.1} parent=11 // pred_check_branch
          %219 = sbr.rel (%p217) target = $region24
        $region23: #{tpu_custom_call.1} parent=11 // pred_region
          _
        $region24: #{tpu_custom_call.1} parent=11 // pred_fallthru
          _
        // Predicated region
        $region25: #{tpu_custom_call.1} parent=11 // pred_check
          %p220 = pneg %p159
        $region26: #{tpu_custom_call.1} parent=11 // pred_check_branch
          %222 = sbr.rel (%p220) target = $region28
        $region27: #{tpu_custom_call.1} parent=11 // pred_region
          _
        $region28: #{tpu_custom_call.1} parent=11 // pred_fallthru
          _
      $region12: #{tpu_custom_call.1} parent=5 // pred_fallthru
        _
      %p223 = scmp.lt.s32.totalorder %s23, 2
      // Predicated region
      $region29: #{tpu_custom_call.1} parent=5 // pred_check
        %p224 = pneg %p223
      $region30: #{tpu_custom_call.1} parent=5 // pred_check_branch
        %226 = sbr.rel (%p224) target = $region32
      $region31: #{tpu_custom_call.1} parent=5 // pred_region
        // Predicated region
        $region33: #{tpu_custom_call.1} parent=31 // pred_check
          %p227 = pneg %p43
        $region34: #{tpu_custom_call.1} parent=31 // pred_check_branch
          %229 = sbr.rel (%p227) target = $region36
        $region35: #{tpu_custom_call.1} parent=31 // pred_region
          %s230 = sand.u32 %s33, 1
          %s231 = scalar_lea.sflag [#allocation4], %s230
          %s232 = sand.u32 %s33, 1
          %s233 = smul.addr %s232, 96
          %s234 = scalar_lea.vmem [#allocation3], %s233
          %s235 = smul.u32 6, %s23
          %237 = vsyncadd %s231, 0
          %s238 = smul.addr %s235, 2
          %s239 = smul.addr %s238, 8
          %s240 = scalar_lea.hbm %s0, %s239
          %s241 = sshll.u32 %s240, 4
          %s242 = int_to_ptr.hbm [resolvable:$true] %s241
          %s243 = sshll.u32 %s234, 4
          %s244 = int_to_ptr.vmem [resolvable:$true] %s243
          %249 = dma.hbm_to_vmem [thread:$0]  %s242, 1536, %s244, %s231, 128, 128, 8
        $region36: #{tpu_custom_call.1} parent=31 // pred_fallthru
          _
        // Predicated region
        $region37: #{tpu_custom_call.1} parent=31 // pred_check
          %p250 = pneg %p69
        $region38: #{tpu_custom_call.1} parent=31 // pred_check_branch
          %252 = sbr.rel (%p250) target = $region40
        $region39: #{tpu_custom_call.1} parent=31 // pred_region
          %s253 = sand.u32 %s23, 1
          %s254 = scalar_lea.sflag [#allocation7], %s253
          %s255 = sand.u32 %s59, 1
          %s256 = smul.addr %s255, 12
          %s257 = scalar_lea.vmem [#allocation6], %s256
          %s258 = smul.u32 6, %s23
          %260 = vsyncadd %s254, 0
          %s261 = smul.addr %s258, 2
          %s262 = scalar_lea.hbm %s1, %s261
          %s263 = sshll.u32 %s262, 4
          %s264 = int_to_ptr.hbm [resolvable:$true] %s263
          %s265 = sshll.u32 %s257, 4
          %s266 = int_to_ptr.vmem [resolvable:$true] %s265
          %271 = dma.hbm_to_vmem [thread:$0]  %s264, 192, %s266, %s254, 32, 32, 2
        $region40: #{tpu_custom_call.1} parent=31 // pred_fallthru
          _
      $region32: #{tpu_custom_call.1} parent=5 // pred_fallthru
        _
      %p272 = scmp.le.s32.totalorder 1, %s23
      %p273 = scmp.lt.s32.totalorder %s23, 3
      %p274 = pnand %p272, %p273
      %p275 = pneg %p274
      // Predicated region
      $region41: #{tpu_custom_call.1} parent=5 // pred_check
        _
      $region42: #{tpu_custom_call.1} parent=5 // pred_check_branch
        %277 = sbr.rel (%p274) target = $region44
      $region43: #{tpu_custom_call.1} parent=5 // pred_region
        %s278 = ssub.s32 %s23, 1
        %s279 = sand.u32 %s36, 1
        %s280 = scalar_lea.sflag [#allocation4], %s279
        %s281 = sand.u32 %s36, 1
        %s282 = smul.addr %s281, 96
        %s283 = scalar_lea.vmem [#allocation3], %s282
        // Predicated region
        $region45: #{tpu_custom_call.1} parent=43 // pred_check
          %p284 = pneg %p49
        $region46: #{tpu_custom_call.1} parent=43 // pred_check_branch
          %286 = sbr.rel (%p284) target = $region48
        $region47: #{tpu_custom_call.1} parent=43 // pred_region
          %288 = dma.done %s280, 1536
        $region48: #{tpu_custom_call.1} parent=43 // pred_fallthru
          _
        %s289 = sand.u32 %s28, 1
        %s290 = scalar_lea.sflag [#allocation7], %s289
        %s291 = sand.u32 %s62, 1
        %s292 = smul.addr %s291, 12
        %s293 = scalar_lea.vmem [#allocation6], %s292
        // Predicated region
        $region49: #{tpu_custom_call.1} parent=43 // pred_check
          %p294 = pneg %p75
        $region50: #{tpu_custom_call.1} parent=43 // pred_check_branch
          %296 = sbr.rel (%p294) target = $region52
        $region51: #{tpu_custom_call.1} parent=43 // pred_region
          %298 = dma.done %s290, 192
        $region52: #{tpu_custom_call.1} parent=43 // pred_fallthru
          _
        // Predicated region
        $region53: #{tpu_custom_call.1} parent=43 // pred_check
          %p299 = pneg %p96
        $region54: #{tpu_custom_call.1} parent=43 // pred_check_branch
          %301 = sbr.rel (%p299) target = $region56
        $region55: #{tpu_custom_call.1} parent=43 // pred_region
          %303 = dma.done [#allocation7], 512
        $region56: #{tpu_custom_call.1} parent=43 // pred_fallthru
          _
        %s304 = sand.u32 %s36, 1
        %s305 = scalar_lea.sflag [#allocation4], %s304
        %s306 = sand.u32 %s36, 1
        %s307 = smul.addr %s306, 96
        %s308 = scalar_lea.vmem [#allocation3], %s307
        %p309 = pneg %p49
        %p310 = pneg %p46
        %s311 = sand.u32 %s28, 1
        %s312 = scalar_lea.sflag [#allocation7], %s311
        %s313 = sand.u32 %s62, 1
        %s314 = smul.addr %s313, 12
        %s315 = scalar_lea.vmem [#allocation6], %s314
        %p316 = pneg %p75
        %p317 = pneg %p72
        %p318 = pneg %p96
        %p319 = pneg %p93
        %p320 = pneg %p117
        %p321 = pneg %p114
        %p322 = pneg %p138
        %p323 = pneg %p135
        %p324 = pneg %p159
        %p325 = pneg %p156
        %p326 = pneg %p185
        %p327 = pneg %p182
        %s328 = sand.u32 %s172, 1
        %s329 = scalar_lea.sflag [#allocation5], %s328
        %s330 = sand.u32 %s172, 1
        %s331 = smul.addr %s330, 12
        %s332 = scalar_lea.vmem [#allocation9], %s331
        %s333 = smul.u32 6, %s28
        %s334 = smul.u32 6, %s28
        %s335 = smul.u32 6, %s28
        %v336 = vld [vmem:[%s283] sm:$0xff]
        %v337 = vld [vmem:[%s283 + $0x8] sm:$0xff]
        %v338 = vld [vmem:[%s283 + $0x10] sm:$0xff]
        %v339 = vld [vmem:[%s283 + $0x18] sm:$0xff]
        %v340 = vld [vmem:[%s283 + $0x20] sm:$0xff]
        %v341 = vld [vmem:[%s283 + $0x28] sm:$0xff]
        %v342 = vld [vmem:[%s283 + $0x30] sm:$0xff]
        %v343 = vld [vmem:[%s283 + $0x38] sm:$0xff]
        %v344 = vld [vmem:[%s283 + $0x40] sm:$0xff]
        %v345 = vld [vmem:[%s283 + $0x48] sm:$0xff]
        %v346 = vld [vmem:[%s283 + $0x50] sm:$0xff]
        %v347 = vld [vmem:[%s283 + $0x58] sm:$0xff]
        %v348 = vld [vmem:[#allocation8] sm:$0xff]
        %v349 = vld [vmem:[#allocation8 + $0x8] sm:$0xff]
        %v350 = vld [vmem:[#allocation8 + $0x10] sm:$0xff]
        %v351 = vld [vmem:[#allocation8 + $0x18] sm:$0xff]
        %v352 = vld [vmem:[%s3] sm:$0x1]
        %v354 = vperm.slane %v352, 0
        %vm356 = vcmask 261120
        %v358 = vsel %vm356, %v336, 0
        %v361 = vsel %vm356, %v337, 0
        %v364 = vsel %vm356, %v338, 0
        %v367 = vsel %vm356, %v339, 0
        %v370 = vsel %vm356, %v340, 0
        %v373 = vsel %vm356, %v341, 0
        %v376 = vsel %vm356, %v342, 0
        %v379 = vsel %vm356, %v343, 0
        %v382 = vsel %vm356, %v344, 0
        %v385 = vsel %vm356, %v345, 0
        %v388 = vsel %vm356, %v346, 0
        %v391 = vsel %vm356, %v347, 0
        %393 = vmatpush.msra.mxu0 0.0
        %394 = vmatpush.msra.mxu0 0.0
        %395 = vmatpush.msra.mxu0 0.0
        %396 = vmatpush.msra.mxu0 0.0
        %397 = vmatpush.msra.mxu0 0.0
        %398 = vmatpush.msra.mxu0 0.0
        %399 = vmatpush.msra.mxu0 0.0
        %400 = vmatpush.msra.mxu0 0.0
        %401 = vmatpush.msra.mxu0 0.0
        %402 = vmatpush.msra.mxu0 0.0
        %403 = vmatpush.msra.mxu0 0.0
        %404 = vmatpush.msra.mxu0 0.0
        %405 = vmatpush.msra.mxu0 %v351
        %406 = vmatpush.msra.mxu0 %v350
        %407 = vmatpush.msra.mxu0 %v349
        %408 = vmatpush.msra.mxu0 %v348
        %409 = vmatmul.f32.gmra.mxu0 %v358
        %v410 = vpop.f32.mrf.mxu0
        %v411 = vadd.f32 %v354, %v410
        %412 = vmatmul.f32.gmra.mxu0 %v361
        %v413 = vpop.f32.mrf.mxu0
        %v414 = vadd.f32 %v354, %v413
        %415 = vmatmul.f32.gmra.mxu0 %v364
        %v416 = vpop.f32.mrf.mxu0
        %v417 = vadd.f32 %v354, %v416
        %418 = vmatmul.f32.gmra.mxu0 %v367
        %v419 = vpop.f32.mrf.mxu0
        %v420 = vadd.f32 %v354, %v419
        %421 = vmatmul.f32.gmra.mxu0 %v370
        %v422 = vpop.f32.mrf.mxu0
        %v423 = vadd.f32 %v354, %v422
        %424 = vmatmul.f32.gmra.mxu0 %v373
        %v425 = vpop.f32.mrf.mxu0
        %v426 = vadd.f32 %v354, %v425
        %427 = vmatmul.f32.gmra.mxu0 %v376
        %v428 = vpop.f32.mrf.mxu0
        %v429 = vadd.f32 %v354, %v428
        %430 = vmatmul.f32.gmra.mxu0 %v379
        %v431 = vpop.f32.mrf.mxu0
        %v432 = vadd.f32 %v354, %v431
        %433 = vmatmul.f32.gmra.mxu0 %v382
        %v434 = vpop.f32.mrf.mxu0
        %v435 = vadd.f32 %v354, %v434
        %436 = vmatmul.f32.gmra.mxu0 %v385
        %v437 = vpop.f32.mrf.mxu0
        %v438 = vadd.f32 %v354, %v437
        %439 = vmatmul.f32.gmra.mxu0 %v388
        %v440 = vpop.f32.mrf.mxu0
        %v441 = vadd.f32 %v354, %v440
        %442 = vmatmul.f32.gmra.mxu0 %v391
        %v443 = vpop.f32.mrf.mxu0
        %v444 = vadd.f32 %v354, %v443
        %445 = vdwg.mxu0
        %v446 = vtanh.pop %v411
        %v447 = vtanh.pop %v414
        %v448 = vtanh.pop %v417
        %v449 = vtanh.pop %v420
        %v450 = vtanh.pop %v423
        %v451 = vtanh.pop %v426
        %v452 = vtanh.pop %v429
        %v453 = vtanh.pop %v432
        %v454 = vtanh.pop %v435
        %v455 = vtanh.pop %v438
        %v456 = vtanh.pop %v441
        %v457 = vtanh.pop %v444
        %v458 = vld [vmem:[%s4] sm:$0x1]
        %v460 = vperm.slane %v458, 0
        %v461 = vld [vmem:[#allocation2] sm:$0x1]
        %v463 = vperm.slane %v461, 0
        %464 = vset.pattern.permute.xlu0 0
        %465 = vperm.xlu0 %464, %v463
        %v466 = vpop.permute.xlu0 %465
        %v468 = vsel %vm356, %v460, 0
        %v471 = vsel %vm356, %v446, 0
        %v474 = vsel %vm356, %v447, 0
        %476 = vmatpush.xpose.msra.mxu0 0.0
        %477 = vmatpush.xpose.msra.mxu0 0.0
        %478 = vmatpush.xpose.msra.mxu0 0.0
        %479 = vmatpush.xpose.msra.mxu0 0.0
        %480 = vmatpush.xpose.msra.mxu0 0.0
        %481 = vmatpush.xpose.msra.mxu0 0.0
        %482 = vmatpush.xpose.msra.mxu0 0.0
        %483 = vmatpush.xpose.msra.mxu0 0.0
        %484 = vmatpush.xpose.msra.mxu0 0.0
        %485 = vmatpush.xpose.msra.mxu0 0.0
        %486 = vmatpush.xpose.msra.mxu0 0.0
        %487 = vmatpush.xpose.msra.mxu0 0.0
        %488 = vmatpush.xpose.msra.mxu0 0.0
        %489 = vmatpush.xpose.msra.mxu0 0.0
        %490 = vmatpush.xpose.msra.mxu0 %v474
        %491 = vmatpush.xpose.msra.mxu0 %v471
        %492 = vmatmul.f32.gmra.mxu0 %v468
        %v493 = vpop.f32.mrf.mxu0
        %v494 = vadd.f32 %v466, %v493
        %495 = vdwg.mxu0
        %v497 = vsel %vm356, %v448, 0
        %v500 = vsel %vm356, %v449, 0
        %502 = vmatpush.xpose.msra.mxu0 0.0
        %503 = vmatpush.xpose.msra.mxu0 0.0
        %504 = vmatpush.xpose.msra.mxu0 0.0
        %505 = vmatpush.xpose.msra.mxu0 0.0
        %506 = vmatpush.xpose.msra.mxu0 0.0
        %507 = vmatpush.xpose.msra.mxu0 0.0
        %508 = vmatpush.xpose.msra.mxu0 0.0
        %509 = vmatpush.xpose.msra.mxu0 0.0
        %510 = vmatpush.xpose.msra.mxu0 0.0
        %511 = vmatpush.xpose.msra.mxu0 0.0
        %512 = vmatpush.xpose.msra.mxu0 0.0
        %513 = vmatpush.xpose.msra.mxu0 0.0
        %514 = vmatpush.xpose.msra.mxu0 0.0
        %515 = vmatpush.xpose.msra.mxu0 0.0
        %516 = vmatpush.xpose.msra.mxu0 %v500
        %517 = vmatpush.xpose.msra.mxu0 %v497
        %518 = vmatmul.f32.gmra.mxu0 %v468
        %v519 = vpop.f32.mrf.mxu0
        %v520 = vadd.f32 %v466, %v519
        %521 = vdwg.mxu0
        %v523 = vsel %vm356, %v450, 0
        %v526 = vsel %vm356, %v451, 0
        %528 = vmatpush.xpose.msra.mxu0 0.0
        %529 = vmatpush.xpose.msra.mxu0 0.0
        %530 = vmatpush.xpose.msra.mxu0 0.0
        %531 = vmatpush.xpose.msra.mxu0 0.0
        %532 = vmatpush.xpose.msra.mxu0 0.0
        %533 = vmatpush.xpose.msra.mxu0 0.0
        %534 = vmatpush.xpose.msra.mxu0 0.0
        %535 = vmatpush.xpose.msra.mxu0 0.0
        %536 = vmatpush.xpose.msra.mxu0 0.0
        %537 = vmatpush.xpose.msra.mxu0 0.0
        %538 = vmatpush.xpose.msra.mxu0 0.0
        %539 = vmatpush.xpose.msra.mxu0 0.0
        %540 = vmatpush.xpose.msra.mxu0 0.0
        %541 = vmatpush.xpose.msra.mxu0 0.0
        %542 = vmatpush.xpose.msra.mxu0 %v526
        %543 = vmatpush.xpose.msra.mxu0 %v523
        %544 = vmatmul.f32.gmra.mxu0 %v468
        %v545 = vpop.f32.mrf.mxu0
        %v546 = vadd.f32 %v466, %v545
        %547 = vdwg.mxu0
        %v549 = vsel %vm356, %v452, 0
        %v552 = vsel %vm356, %v453, 0
        %554 = vmatpush.xpose.msra.mxu0 0.0
        %555 = vmatpush.xpose.msra.mxu0 0.0
        %556 = vmatpush.xpose.msra.mxu0 0.0
        %557 = vmatpush.xpose.msra.mxu0 0.0
        %558 = vmatpush.xpose.msra.mxu0 0.0
        %559 = vmatpush.xpose.msra.mxu0 0.0
        %560 = vmatpush.xpose.msra.mxu0 0.0
        %561 = vmatpush.xpose.msra.mxu0 0.0
        %562 = vmatpush.xpose.msra.mxu0 0.0
        %563 = vmatpush.xpose.msra.mxu0 0.0
        %564 = vmatpush.xpose.msra.mxu0 0.0
        %565 = vmatpush.xpose.msra.mxu0 0.0
        %566 = vmatpush.xpose.msra.mxu0 0.0
        %567 = vmatpush.xpose.msra.mxu0 0.0
        %568 = vmatpush.xpose.msra.mxu0 %v552
        %569 = vmatpush.xpose.msra.mxu0 %v549
        %570 = vmatmul.f32.gmra.mxu0 %v468
        %v571 = vpop.f32.mrf.mxu0
        %v572 = vadd.f32 %v466, %v571
        %573 = vdwg.mxu0
        %v575 = vsel %vm356, %v454, 0
        %v578 = vsel %vm356, %v455, 0
        %580 = vmatpush.xpose.msra.mxu0 0.0
        %581 = vmatpush.xpose.msra.mxu0 0.0
        %582 = vmatpush.xpose.msra.mxu0 0.0
        %583 = vmatpush.xpose.msra.mxu0 0.0
        %584 = vmatpush.xpose.msra.mxu0 0.0
        %585 = vmatpush.xpose.msra.mxu0 0.0
        %586 = vmatpush.xpose.msra.mxu0 0.0
        %587 = vmatpush.xpose.msra.mxu0 0.0
        %588 = vmatpush.xpose.msra.mxu0 0.0
        %589 = vmatpush.xpose.msra.mxu0 0.0
        %590 = vmatpush.xpose.msra.mxu0 0.0
        %591 = vmatpush.xpose.msra.mxu0 0.0
        %592 = vmatpush.xpose.msra.mxu0 0.0
        %593 = vmatpush.xpose.msra.mxu0 0.0
        %594 = vmatpush.xpose.msra.mxu0 %v578
        %595 = vmatpush.xpose.msra.mxu0 %v575
        %596 = vmatmul.f32.gmra.mxu0 %v468
        %v597 = vpop.f32.mrf.mxu0
        %v598 = vadd.f32 %v466, %v597
        %599 = vdwg.mxu0
        %v601 = vsel %vm356, %v456, 0
        %v604 = vsel %vm356, %v457, 0
        %606 = vmatpush.xpose.msra.mxu0 0.0
        %607 = vmatpush.xpose.msra.mxu0 0.0
        %608 = vmatpush.xpose.msra.mxu0 0.0
        %609 = vmatpush.xpose.msra.mxu0 0.0
        %610 = vmatpush.xpose.msra.mxu0 0.0
        %611 = vmatpush.xpose.msra.mxu0 0.0
        %612 = vmatpush.xpose.msra.mxu0 0.0
        %613 = vmatpush.xpose.msra.mxu0 0.0
        %614 = vmatpush.xpose.msra.mxu0 0.0
        %615 = vmatpush.xpose.msra.mxu0 0.0
        %616 = vmatpush.xpose.msra.mxu0 0.0
        %617 = vmatpush.xpose.msra.mxu0 0.0
        %618 = vmatpush.xpose.msra.mxu0 0.0
        %619 = vmatpush.xpose.msra.mxu0 0.0
        %620 = vmatpush.xpose.msra.mxu0 %v604
        %621 = vmatpush.xpose.msra.mxu0 %v601
        %622 = vmatmul.f32.gmra.mxu0 %v468
        %v623 = vpop.f32.mrf.mxu0
        %v624 = vadd.f32 %v466, %v623
        %625 = vdwg.mxu0
        %v626 = vld [vmem:[%s293] sm:$0x3]
        %v627 = vld [vmem:[%s293 + $0x2] sm:$0x3]
        %v628 = vld [vmem:[%s293 + $0x4] sm:$0x3]
        %v629 = vld [vmem:[%s293 + $0x6] sm:$0x3]
        %v630 = vld [vmem:[%s293 + $0x8] sm:$0x3]
        %v631 = vld [vmem:[%s293 + $0xa] sm:$0x3]
        %v632 = vmul.f32 %v626, %v494
        %v633 = vmul.f32 %v627, %v520
        %v634 = vmul.f32 %v628, %v546
        %v635 = vmul.f32 %v629, %v572
        %v636 = vmul.f32 %v630, %v598
        %v637 = vmul.f32 %v631, %v624
        %v638 = vsub.f32 1.0, %v626
        %v639 = vsub.f32 1.0, %v627
        %v640 = vsub.f32 1.0, %v628
        %v641 = vsub.f32 1.0, %v629
        %v642 = vsub.f32 1.0, %v630
        %v643 = vsub.f32 1.0, %v631
        %v644 = vmul.f32 %v638, -10000.0
        %v645 = vmul.f32 %v639, -10000.0
        %v646 = vmul.f32 %v640, -10000.0
        %v647 = vmul.f32 %v641, -10000.0
        %v648 = vmul.f32 %v642, -10000.0
        %v649 = vmul.f32 %v643, -10000.0
        %v650 = vadd.f32 %v632, %v644
        %v651 = vadd.f32 %v633, %v645
        %v652 = vadd.f32 %v634, %v646
        %v653 = vadd.f32 %v635, %v647
        %v654 = vadd.f32 %v636, %v648
        %v655 = vadd.f32 %v637, %v649
        %vm656 = vcmask 123904
        %v657 = vsel %vm656, %v650, -inf
        %658 = vmax.xlane.f32.xlu0 %v657
        %v659 = vpop.xlane.xlu0 %658
        %v660 = vsel %vm656, %v651, -inf
        %661 = vmax.xlane.f32.xlu0 %v660
        %v662 = vpop.xlane.xlu0 %661
        %v663 = vsel %vm656, %v652, -inf
        %664 = vmax.xlane.f32.xlu0 %v663
        %v665 = vpop.xlane.xlu0 %664
        %v666 = vsel %vm656, %v653, -inf
        %667 = vmax.xlane.f32.xlu0 %v666
        %v668 = vpop.xlane.xlu0 %667
        %v669 = vsel %vm656, %v654, -inf
        %670 = vmax.xlane.f32.xlu0 %v669
        %v671 = vpop.xlane.xlu0 %670
        %v672 = vsel %vm656, %v655, -inf
        %673 = vmax.xlane.f32.xlu0 %v672
        %v674 = vpop.xlane.xlu0 %673
        %v675 = vsub.f32 %v650, %v659
        %v676 = vsub.f32 %v651, %v662
        %v677 = vsub.f32 %v652, %v665
        %v678 = vsub.f32 %v653, %v668
        %v679 = vsub.f32 %v654, %v671
        %v680 = vsub.f32 %v655, %v674
        %v681 = vmul.f32 %v675, 1.442695
        %v682 = vpow.pop %v681
        %v683 = vmul.f32 %v676, 1.442695
        %v684 = vpow.pop %v683
        %v685 = vmul.f32 %v677, 1.442695
        %v686 = vpow.pop %v685
        %v687 = vmul.f32 %v678, 1.442695
        %v688 = vpow.pop %v687
        %v689 = vmul.f32 %v679, 1.442695
        %v690 = vpow.pop %v689
        %v691 = vmul.f32 %v680, 1.442695
        %v692 = vpow.pop %v691
        %v693 = vsel %vm656, %v682, 0.0
        %694 = vadd.xlane.f32.xlu0 %v693
        %v695 = vpop.xlane.xlu0 %694
        %v696 = vsel %vm656, %v684, 0.0
        %697 = vadd.xlane.f32.xlu0 %v696
        %v698 = vpop.xlane.xlu0 %697
        %v699 = vsel %vm656, %v686, 0.0
        %700 = vadd.xlane.f32.xlu0 %v699
        %v701 = vpop.xlane.xlu0 %700
        %v702 = vsel %vm656, %v688, 0.0
        %703 = vadd.xlane.f32.xlu0 %v702
        %v704 = vpop.xlane.xlu0 %703
        %v705 = vsel %vm656, %v690, 0.0
        %706 = vadd.xlane.f32.xlu0 %v705
        %v707 = vpop.xlane.xlu0 %706
        %v708 = vsel %vm656, %v692, 0.0
        %709 = vadd.xlane.f32.xlu0 %v708
        %v710 = vpop.xlane.xlu0 %709
        %v711 = vrcp.pop %v695
        %v712 = vmul.f32 %v695, %v711
        %v713 = vsub.f32 1.0, %v712
        %v714 = vmul.f32 %v711, %v713
        %v715 = vadd.f32 %v711, %v714
        %vm716 = vweird.f32 %v695
        %vm717 = vweird.f32 %v711
        %vm718 = vmor %vm716, %vm717
        %v719 = vsel %vm718, %v711, %v715
        %v720 = vand.u32 2147483647, %v695
        %vm721 = vcmp.eq.f32.partialorder %v720, 8.507059e+37
        %v722 = vand.u32 %v695, 2147483648
        %v723 = vor.u32 1.1754944e-38, %v722
        %v724 = vsel %vm721, %v723, %v719
        %v725 = vmul.f32 %v682, %v724
        %v726 = vrcp.pop %v698
        %v727 = vmul.f32 %v698, %v726
        %v728 = vsub.f32 1.0, %v727
        %v729 = vmul.f32 %v726, %v728
        %v730 = vadd.f32 %v726, %v729
        %vm731 = vweird.f32 %v698
        %vm732 = vweird.f32 %v726
        %vm733 = vmor %vm731, %vm732
        %v734 = vsel %vm733, %v726, %v730
        %v735 = vand.u32 2147483647, %v698
        %vm736 = vcmp.eq.f32.partialorder %v735, 8.507059e+37
        %v737 = vand.u32 %v698, 2147483648
        %v738 = vor.u32 1.1754944e-38, %v737
        %v739 = vsel %vm736, %v738, %v734
        %v740 = vmul.f32 %v684, %v739
        %v741 = vrcp.pop %v701
        %v742 = vmul.f32 %v701, %v741
        %v743 = vsub.f32 1.0, %v742
        %v744 = vmul.f32 %v741, %v743
        %v745 = vadd.f32 %v741, %v744
        %vm746 = vweird.f32 %v701
        %vm747 = vweird.f32 %v741
        %vm748 = vmor %vm746, %vm747
        %v749 = vsel %vm748, %v741, %v745
        %v750 = vand.u32 2147483647, %v701
        %vm751 = vcmp.eq.f32.partialorder %v750, 8.507059e+37
        %v752 = vand.u32 %v701, 2147483648
        %v753 = vor.u32 1.1754944e-38, %v752
        %v754 = vsel %vm751, %v753, %v749
        %v755 = vmul.f32 %v686, %v754
        %v756 = vrcp.pop %v704
        %v757 = vmul.f32 %v704, %v756
        %v758 = vsub.f32 1.0, %v757
        %v759 = vmul.f32 %v756, %v758
        %v760 = vadd.f32 %v756, %v759
        %vm761 = vweird.f32 %v704
        %vm762 = vweird.f32 %v756
        %vm763 = vmor %vm761, %vm762
        %v764 = vsel %vm763, %v756, %v760
        %v765 = vand.u32 2147483647, %v704
        %vm766 = vcmp.eq.f32.partialorder %v765, 8.507059e+37
        %v767 = vand.u32 %v704, 2147483648
        %v768 = vor.u32 1.1754944e-38, %v767
        %v769 = vsel %vm766, %v768, %v764
        %v770 = vmul.f32 %v688, %v769
        %v771 = vrcp.pop %v707
        %v772 = vmul.f32 %v707, %v771
        %v773 = vsub.f32 1.0, %v772
        %v774 = vmul.f32 %v771, %v773
        %v775 = vadd.f32 %v771, %v774
        %vm776 = vweird.f32 %v707
        %vm777 = vweird.f32 %v771
        %vm778 = vmor %vm776, %vm777
        %v779 = vsel %vm778, %v771, %v775
        %v780 = vand.u32 2147483647, %v707
        %vm781 = vcmp.eq.f32.partialorder %v780, 8.507059e+37
        %v782 = vand.u32 %v707, 2147483648
        %v783 = vor.u32 1.1754944e-38, %v782
        %v784 = vsel %vm781, %v783, %v779
        %v785 = vmul.f32 %v690, %v784
        %v786 = vrcp.pop %v710
        %v787 = vmul.f32 %v710, %v786
        %v788 = vsub.f32 1.0, %v787
        %v789 = vmul.f32 %v786, %v788
        %v790 = vadd.f32 %v786, %v789
        %vm791 = vweird.f32 %v710
        %vm792 = vweird.f32 %v786
        %vm793 = vmor %vm791, %vm792
        %v794 = vsel %vm793, %v786, %v790
        %v795 = vand.u32 2147483647, %v710
        %vm796 = vcmp.eq.f32.partialorder %v795, 8.507059e+37
        %v797 = vand.u32 %v710, 2147483648
        %v798 = vor.u32 1.1754944e-38, %v797
        %v799 = vsel %vm796, %v798, %v794
        %v800 = vmul.f32 %v692, %v799
        %vm801 = vcmask 130048
        %v803 = vsel %vm801, %v725, 0
        %805 = vmatpush.msra.mxu0 0.0
        %806 = vmatpush.msra.mxu0 0.0
        %807 = vmatpush.msra.mxu0 0.0
        %808 = vmatpush.msra.mxu0 0.0
        %809 = vmatpush.msra.mxu0 0.0
        %810 = vmatpush.msra.mxu0 0.0
        %811 = vmatpush.msra.mxu0 0.0
        %812 = vmatpush.msra.mxu0 0.0
        %813 = vmatpush.msra.mxu0 0.0
        %814 = vmatpush.msra.mxu0 0.0
        %815 = vmatpush.msra.mxu0 0.0
        %816 = vmatpush.msra.mxu0 0.0
        %817 = vmatpush.msra.mxu0 0.0
        %818 = vmatpush.msra.mxu0 0.0
        %819 = vmatpush.msra.mxu0 %v337
        %820 = vmatpush.msra.mxu0 %v336
        %821 = vmatmul.f32.gmra.mxu0 %v803
        %v822 = vpop.f32.mrf.mxu0
        %v823 = vadd.f32 0.0, %v822
        %824 = vdwg.mxu0
        %v826 = vsel %vm801, %v740, 0
        %828 = vmatpush.msra.mxu0 0.0
        %829 = vmatpush.msra.mxu0 0.0
        %830 = vmatpush.msra.mxu0 0.0
        %831 = vmatpush.msra.mxu0 0.0
        %832 = vmatpush.msra.mxu0 0.0
        %833 = vmatpush.msra.mxu0 0.0
        %834 = vmatpush.msra.mxu0 0.0
        %835 = vmatpush.msra.mxu0 0.0
        %836 = vmatpush.msra.mxu0 0.0
        %837 = vmatpush.msra.mxu0 0.0
        %838 = vmatpush.msra.mxu0 0.0
        %839 = vmatpush.msra.mxu0 0.0
        %840 = vmatpush.msra.mxu0 0.0
        %841 = vmatpush.msra.mxu0 0.0
        %842 = vmatpush.msra.mxu0 %v339
        %843 = vmatpush.msra.mxu0 %v338
        %844 = vmatmul.f32.gmra.mxu0 %v826
        %v845 = vpop.f32.mrf.mxu0
        %v846 = vadd.f32 0.0, %v845
        %847 = vdwg.mxu0
        %v849 = vsel %vm801, %v755, 0
        %851 = vmatpush.msra.mxu0 0.0
        %852 = vmatpush.msra.mxu0 0.0
        %853 = vmatpush.msra.mxu0 0.0
        %854 = vmatpush.msra.mxu0 0.0
        %855 = vmatpush.msra.mxu0 0.0
        %856 = vmatpush.msra.mxu0 0.0
        %857 = vmatpush.msra.mxu0 0.0
        %858 = vmatpush.msra.mxu0 0.0
        %859 = vmatpush.msra.mxu0 0.0
        %860 = vmatpush.msra.mxu0 0.0
        %861 = vmatpush.msra.mxu0 0.0
        %862 = vmatpush.msra.mxu0 0.0
        %863 = vmatpush.msra.mxu0 0.0
        %864 = vmatpush.msra.mxu0 0.0
        %865 = vmatpush.msra.mxu0 %v341
        %866 = vmatpush.msra.mxu0 %v340
        %867 = vmatmul.f32.gmra.mxu0 %v849
        %v868 = vpop.f32.mrf.mxu0
        %v869 = vadd.f32 0.0, %v868
        %870 = vdwg.mxu0
        %v872 = vsel %vm801, %v770, 0
        %874 = vmatpush.msra.mxu0 0.0
        %875 = vmatpush.msra.mxu0 0.0
        %876 = vmatpush.msra.mxu0 0.0
        %877 = vmatpush.msra.mxu0 0.0
        %878 = vmatpush.msra.mxu0 0.0
        %879 = vmatpush.msra.mxu0 0.0
        %880 = vmatpush.msra.mxu0 0.0
        %881 = vmatpush.msra.mxu0 0.0
        %882 = vmatpush.msra.mxu0 0.0
        %883 = vmatpush.msra.mxu0 0.0
        %884 = vmatpush.msra.mxu0 0.0
        %885 = vmatpush.msra.mxu0 0.0
        %886 = vmatpush.msra.mxu0 0.0
        %887 = vmatpush.msra.mxu0 0.0
        %888 = vmatpush.msra.mxu0 %v343
        %889 = vmatpush.msra.mxu0 %v342
        %890 = vmatmul.f32.gmra.mxu0 %v872
        %v891 = vpop.f32.mrf.mxu0
        %v892 = vadd.f32 0.0, %v891
        %893 = vdwg.mxu0
        %v895 = vsel %vm801, %v785, 0
        %897 = vmatpush.msra.mxu0 0.0
        %898 = vmatpush.msra.mxu0 0.0
        %899 = vmatpush.msra.mxu0 0.0
        %900 = vmatpush.msra.mxu0 0.0
        %901 = vmatpush.msra.mxu0 0.0
        %902 = vmatpush.msra.mxu0 0.0
        %903 = vmatpush.msra.mxu0 0.0
        %904 = vmatpush.msra.mxu0 0.0
        %905 = vmatpush.msra.mxu0 0.0
        %906 = vmatpush.msra.mxu0 0.0
        %907 = vmatpush.msra.mxu0 0.0
        %908 = vmatpush.msra.mxu0 0.0
        %909 = vmatpush.msra.mxu0 0.0
        %910 = vmatpush.msra.mxu0 0.0
        %911 = vmatpush.msra.mxu0 %v345
        %912 = vmatpush.msra.mxu0 %v344
        %913 = vmatmul.f32.gmra.mxu0 %v895
        %v914 = vpop.f32.mrf.mxu0
        %v915 = vadd.f32 0.0, %v914
        %916 = vdwg.mxu0
        %v918 = vsel %vm801, %v800, 0
        %920 = vmatpush.msra.mxu0 0.0
        %921 = vmatpush.msra.mxu0 0.0
        %922 = vmatpush.msra.mxu0 0.0
        %923 = vmatpush.msra.mxu0 0.0
        %924 = vmatpush.msra.mxu0 0.0
        %925 = vmatpush.msra.mxu0 0.0
        %926 = vmatpush.msra.mxu0 0.0
        %927 = vmatpush.msra.mxu0 0.0
        %928 = vmatpush.msra.mxu0 0.0
        %929 = vmatpush.msra.mxu0 0.0
        %930 = vmatpush.msra.mxu0 0.0
        %931 = vmatpush.msra.mxu0 0.0
        %932 = vmatpush.msra.mxu0 0.0
        %933 = vmatpush.msra.mxu0 0.0
        %934 = vmatpush.msra.mxu0 %v347
        %935 = vmatpush.msra.mxu0 %v346
        %936 = vmatmul.f32.gmra.mxu0 %v918
        %v937 = vpop.f32.mrf.mxu0
        %v938 = vadd.f32 0.0, %v937
        %939 = vdwg.mxu0
        %vm940 = vcmask 254976
        %941 = vst.msk [vmem:[%s332] sm:$0x3] %vm940, %v823
        %942 = vst.msk [vmem:[%s332 + $0x2] sm:$0x3] %vm940, %v846
        %943 = vst.msk [vmem:[%s332 + $0x4] sm:$0x3] %vm940, %v869
        %944 = vst.msk [vmem:[%s332 + $0x6] sm:$0x3] %vm940, %v892
        %945 = vst.msk [vmem:[%s332 + $0x8] sm:$0x3] %vm940, %v915
        %946 = vst.msk [vmem:[%s332 + $0xa] sm:$0x3] %vm940, %v938
        %s947 = sand.u32 %s172, 1
        %s948 = scalar_lea.sflag [#allocation5], %s947
        %s949 = sand.u32 %s172, 1
        %s950 = smul.addr %s949, 12
        %s951 = scalar_lea.vmem [#allocation9], %s950
        // Predicated region
        $region57: #{tpu_custom_call.1} parent=43 // pred_check
          %p952 = pneg %p182
        $region58: #{tpu_custom_call.1} parent=43 // pred_check_branch
          %954 = sbr.rel (%p952) target = $region60
        $region59: #{tpu_custom_call.1} parent=43 // pred_region
          %s955 = smul.u32 6, %s28
          %957 = vsyncadd %s948, 0
          %s958 = smul.addr %s955, 2
          %s959 = scalar_lea.hbm %s6, %s958
          %s960 = sshll.u32 %s951, 4
          %s961 = int_to_ptr.vmem [resolvable:$true] %s960
          %s962 = sshll.u32 %s959, 4
          %s963 = int_to_ptr.hbm [resolvable:$true] %s962
          %968 = dma.vmem_to_hbm [thread:$0]  %s961, 192, %s963, %s948, 32, 32, 2
        $region60: #{tpu_custom_call.1} parent=43 // pred_fallthru
          _
      $region44: #{tpu_custom_call.1} parent=5 // pred_fallthru
        _
      %p969 = scmp.le.s32.totalorder 2, %s23
      // Predicated region
      $region61: #{tpu_custom_call.1} parent=5 // pred_check
        %p970 = pneg %p969
      $region62: #{tpu_custom_call.1} parent=5 // pred_check_branch
        %972 = sbr.rel (%p970) target = $region64
      $region63: #{tpu_custom_call.1} parent=5 // pred_region
        %s973 = ssub.s32 %s23, 2
        // Predicated region
        $region65: #{tpu_custom_call.1} parent=63 // pred_check
          %p974 = pneg %p188
        $region66: #{tpu_custom_call.1} parent=63 // pred_check_branch
          %976 = sbr.rel (%p974) target = $region68
        $region67: #{tpu_custom_call.1} parent=63 // pred_region
          %s977 = sand.u32 %s173, 1
          %s978 = scalar_lea.sflag [#allocation5], %s977
          %s979 = sand.u32 %s173, 1
          %s980 = smul.addr %s979, 12
          %s981 = scalar_lea.vmem [#allocation9], %s980
          %983 = dma.done %s978, 192
        $region68: #{tpu_custom_call.1} parent=63 // pred_fallthru
          _
      $region64: #{tpu_custom_call.1} parent=5 // pred_fallthru
        _
    $region6: #{tpu_custom_call.1} parent=1 // loop_footer
      %s27 = sadd.s32 1, %s23
    $region7: #{tpu_custom_call.1} parent=1 // loop_footer_branch
      %22 = sbr.rel target = $region3
    $region8: #{tpu_custom_call.1} parent=1 // loop_exit
      _
    %984 = vsyncpa [#allocation4], 1
    %s985 = scalar_lea.sflag [#allocation4], 1
    %986 = vsyncpa %s985, 1
    %987 = vsyncpa [#allocation7], 1
    %s988 = scalar_lea.sflag [#allocation7], 1
    %989 = vsyncpa %s988, 1
    %990 = vsyncpa [#allocation5], 1
    %s991 = scalar_lea.sflag [#allocation5], 1
    %992 = vsyncpa %s991, 1

</llo_original>
